<compile_context>
chip_gen: v6e
topology: v6e:2x2x1
jax: 0.10.0
libtpu: 0.0.40
codegen_flags: <defaults>
</compile_context>

<pallas_src>
import functools

import jax
import jax.numpy as jnp
from jax import lax
from jax.experimental import pallas as pl
from jax.experimental.pallas import tpu as pltpu


def _round_up(x, m):
    return (x + m - 1) // m * m


def _residual_linear_kernel(x_lhs_ref, w_ref, b_ref, x_res_ref, o_ref, acc_ref,
                            *, mxu_dtype):
    """Fused  out = x @ W^T + b + x  over a (M, N_out, K) tiled grid."""
    k = pl.program_id(2)

    @pl.when(k == 0)
    def _():
        acc_ref[...] = jnp.zeros_like(acc_ref)

    # Feed the MXU in bf16 (f32 accumulation). The weight stays in torch
    # (out, in) layout; we contract its last dim, so no wrapper transpose.
    x_blk = x_lhs_ref[...].astype(mxu_dtype)          # (tm, tk)
    w_blk = w_ref[...].astype(mxu_dtype)              # (tn, tk)
    acc_ref[...] += lax.dot_general(
        x_blk, w_blk,
        dimension_numbers=(((1,), (1,)), ((), ())),
        preferred_element_type=jnp.float32)

    @pl.when(k == pl.num_programs(2) - 1)
    def _():
        bias = b_ref[...].astype(jnp.float32)         # (1, tn)
        res = x_res_ref[...].astype(jnp.float32)      # (tm, tn) residual block
        o_ref[...] = (acc_ref[...] + bias + res).astype(o_ref.dtype)


def residual_forward(x, weight, bias, *, mxu_dtype=jnp.bfloat16):
    """x: (B, N, D); weight: (D, D) torch-style (out, in); bias: (D,)."""
    B, N, D = x.shape
    assert weight.shape == (D, D) and bias.shape == (D,)
    M = B * N
    x2 = x.reshape(M, D)

    # --- lane-dense, tile-aligned padding & tile selection ----------------
    D_pad = _round_up(D, 128)
    tn = 256 if D_pad % 256 == 0 else 128
    tk = 512 if D_pad % 512 == 0 else (256 if D_pad % 256 == 0 else 128)
    tm = 256 if M >= 256 else _round_up(M, 8)
    M_pad = _round_up(M, tm)

    if (M_pad, D_pad) != (M, D):
        x2p = jnp.pad(x2, ((0, M_pad - M), (0, D_pad - D)))
        wp = jnp.pad(weight, ((0, D_pad - D), (0, D_pad - D)))
        bp = jnp.pad(bias, (0, D_pad - D)).reshape(1, D_pad)
    else:
        x2p, wp, bp = x2, weight, bias.reshape(1, D)

    grid = (M_pad // tm, D_pad // tn, D_pad // tk)
    kernel = functools.partial(_residual_linear_kernel, mxu_dtype=mxu_dtype)

    itemsize = x2p.dtype.itemsize
    cost = pl.CostEstimate(
        flops=2 * M_pad * D_pad * D_pad,
        transcendentals=0,
        bytes_accessed=(2 * x2p.size * itemsize          # x streamed twice
                        + wp.size * wp.dtype.itemsize
                        + bp.size * bp.dtype.itemsize
                        + M_pad * D_pad * itemsize))     # output

    out = pl.pallas_call(
        kernel,
        out_shape=jax.ShapeDtypeStruct((M_pad, D_pad), x.dtype),
        grid_spec=pltpu.PrefetchScalarGridSpec(
            num_scalar_prefetch=0,
            grid=grid,
            in_specs=[
                pl.BlockSpec((tm, tk), lambda i, j, k: (i, k)),   # x, matmul LHS
                pl.BlockSpec((tn, tk), lambda i, j, k: (j, k)),   # W (out, in)
                pl.BlockSpec((1, tn), lambda i, j, k: (0, j)),    # bias
                pl.BlockSpec((tm, tn), lambda i, j, k: (i, j)),   # x, residual
            ],
            out_specs=pl.BlockSpec((tm, tn), lambda i, j, k: (i, j)),
            scratch_shapes=[pltpu.VMEM((tm, tn), jnp.float32)],
        ),
        compiler_params=pltpu.CompilerParams(
            dimension_semantics=("parallel", "parallel", "arbitrary")),
        cost_estimate=cost,
    )(x2p, wp, bp, x2p)

    return out[:M, :D].reshape(B, N, D)


if __name__ == "__main__":
    B, N, D = 2, 8, 32
    key = jax.random.PRNGKey(0)
    kx, kw, kb = jax.random.split(key, 3)

    x = jax.random.normal(kx, (B, N, D), dtype=jnp.float32)
    # Deterministic synthetic parameters for fn = Linear(D, D), torch layout.
    weight = jax.random.normal(kw, (D, D), dtype=jnp.float32) * 0.02  # (out, in)
    bias = jax.random.normal(kb, (D,), dtype=jnp.float32) * 0.02

    out = jax.block_until_ready(residual_forward(x, weight, bias))

    # Reference: fn(x) + x, with the matmul fed in bf16 (matching the kernel's
    # MXU input precision) and f32 accumulation / residual add.
    y_ref = jnp.einsum("bnd,od->bno",
                       x.astype(jnp.bfloat16), weight.astype(jnp.bfloat16),
                       preferred_element_type=jnp.float32)
    ref = y_ref + bias + x

    assert out.shape == (B, N, D)
    assert jnp.allclose(out, ref, atol=1e-4, rtol=1e-4), "mismatch vs reference"
    print("KERNEL_OK")
</pallas_src>

<mosaic_0001>
module attributes {stable_mosaic.version = 11 : i64} {
  func.func @_residual_linear_kernel(%arg0: i32, %arg1: i32, %arg2: i32, %arg3: memref<16x128xf32, #tpu.memory_space<vmem>>, %arg4: memref<128x128xf32, #tpu.memory_space<vmem>>, %arg5: memref<1x128xf32, #tpu.memory_space<vmem>>, %arg6: memref<16x128xf32, #tpu.memory_space<vmem>>, %arg7: memref<16x128xf32, #tpu.memory_space<vmem>>, %arg8: memref<16x128xf32, #tpu.memory_space<vmem>>) attributes {dimension_semantics = [#tpu.dimension_semantics<parallel>, #tpu.dimension_semantics<parallel>, #tpu.dimension_semantics<arbitrary>], iteration_bounds = array<i64: 1, 1, 1>, scalar_prefetch = 0 : i64, scratch_operands = 1 : i64, tpu.core_type = #tpu.core_type<tc>, window_params = [{transform_indices = @transform_0, window_bounds = array<i64: 16, 128>}, {transform_indices = @transform_1, window_bounds = array<i64: 128, 128>}, {transform_indices = @transform_2, window_bounds = array<i64: 1, 128>}, {transform_indices = @transform_3, window_bounds = array<i64: 16, 128>}, {transform_indices = @transform_4, window_bounds = array<i64: 16, 128>}]} {
    %c0_i32 = arith.constant 0 : i32
    %0 = arith.cmpi eq, %arg2, %c0_i32 : i32
    %1 = arith.extui %0 : i1 to i32
    %c0_i32_0 = arith.constant 0 : i32
    %2 = arith.cmpi ne, %1, %c0_i32_0 : i32
    scf.if %2 {
      %cst_10 = arith.constant 0.000000e+00 : f32
      %14 = vector.broadcast %cst_10 : f32 to vector<16x128xf32>
      %c0_11 = arith.constant 0 : index
      %c0_12 = arith.constant 0 : index
      %15 = vector.load %arg8[%c0_11, %c0_12] : memref<16x128xf32, #tpu.memory_space<vmem>>, vector<16x128xf32>
      tpu.vector_store %arg8[%c0_11, %c0_12], %14 {strides = array<i32>} : memref<16x128xf32, #tpu.memory_space<vmem>>, vector<16x128xf32>,
    } else {
    }
    %c0 = arith.constant 0 : index
    %c0_1 = arith.constant 0 : index
    %3 = vector.load %arg3[%c0, %c0_1] : memref<16x128xf32, #tpu.memory_space<vmem>>, vector<16x128xf32>
    %4 = arith.truncf %3 : vector<16x128xf32> to vector<16x128xbf16>
    %c0_2 = arith.constant 0 : index
    %c0_3 = arith.constant 0 : index
    %5 = vector.load %arg4[%c0_2, %c0_3] : memref<128x128xf32, #tpu.memory_space<vmem>>, vector<128x128xf32>
    %6 = arith.truncf %5 : vector<128x128xf32> to vector<128x128xbf16>
    %c0_4 = arith.constant 0 : index
    %c0_5 = arith.constant 0 : index
    %7 = vector.load %arg8[%c0_4, %c0_5] : memref<16x128xf32, #tpu.memory_space<vmem>>, vector<16x128xf32>
    %cst = arith.constant dense<0.000000e+00> : vector<16x128xf32>
    %8 = tpu.matmul %4, %6, %cst {dimension_numbers = #tpu.dot_dimension_numbers<[1], [1], [0], [0], [0, 0, 1, 0], [], []>} : vector<16x128xbf16>, vector<128x128xbf16>, vector<16x128xf32> -> vector<16x128xf32>
    %9 = arith.addf %7, %8 : vector<16x128xf32>
    %c0_6 = arith.constant 0 : index
    %c0_7 = arith.constant 0 : index
    %10 = vector.load %arg8[%c0_6, %c0_7] : memref<16x128xf32, #tpu.memory_space<vmem>>, vector<16x128xf32>
    tpu.vector_store %arg8[%c0_6, %c0_7], %9 {strides = array<i32>} : memref<16x128xf32, #tpu.memory_space<vmem>>, vector<16x128xf32>,
    %c0_i32_8 = arith.constant 0 : i32
    %11 = arith.cmpi eq, %arg2, %c0_i32_8 : i32
    %12 = arith.extui %11 : i1 to i32
    %c0_i32_9 = arith.constant 0 : i32
    %13 = arith.cmpi ne, %12, %c0_i32_9 : i32
    scf.if %13 {
      %c0_10 = arith.constant 0 : index
      %c0_11 = arith.constant 0 : index
      %14 = vector.load %arg5[%c0_10, %c0_11] : memref<1x128xf32, #tpu.memory_space<vmem>>, vector<1x128xf32>
      %c0_12 = arith.constant 0 : index
      %c0_13 = arith.constant 0 : index
      %15 = vector.load %arg6[%c0_12, %c0_13] : memref<16x128xf32, #tpu.memory_space<vmem>>, vector<16x128xf32>
      %c0_14 = arith.constant 0 : index
      %c0_15 = arith.constant 0 : index
      %16 = vector.load %arg8[%c0_14, %c0_15] : memref<16x128xf32, #tpu.memory_space<vmem>>, vector<16x128xf32>
      %17 = vector.broadcast %14 : vector<1x128xf32> to vector<16x128xf32>
      %18 = arith.addf %16, %17 : vector<16x128xf32>
      %19 = arith.addf %18, %15 : vector<16x128xf32>
      %c0_16 = arith.constant 0 : index
      %c0_17 = arith.constant 0 : index
      %20 = vector.load %arg7[%c0_16, %c0_17] : memref<16x128xf32, #tpu.memory_space<vmem>>, vector<16x128xf32>
      tpu.vector_store %arg7[%c0_16, %c0_17], %19 {strides = array<i32>} : memref<16x128xf32, #tpu.memory_space<vmem>>, vector<16x128xf32>,
    } else {
    }
    return
  }
  func.func @transform_0(%arg0: i32, %arg1: i32, %arg2: i32) -> (i32, i32) {
    %c0_i32 = arith.constant 0 : i32
    return %arg0, %arg2 : i32, i32
  }
  func.func @transform_1(%arg0: i32, %arg1: i32, %arg2: i32) -> (i32, i32) {
    %c0_i32 = arith.constant 0 : i32
    return %arg1, %arg2 : i32, i32
  }
  func.func @transform_2(%arg0: i32, %arg1: i32, %arg2: i32) -> (i32, i32) {
    %c0_i32 = arith.constant 0 : i32
    %c0_i32_0 = arith.constant 0 : i32
    return %c0_i32, %arg1 : i32, i32
  }
  func.func @transform_3(%arg0: i32, %arg1: i32, %arg2: i32) -> (i32, i32) {
    %c0_i32 = arith.constant 0 : i32
    return %arg0, %arg1 : i32, i32
  }
  func.func @transform_4(%arg0: i32, %arg1: i32, %arg2: i32) -> (i32, i32) {
    %c0_i32 = arith.constant 0 : i32
    return %arg0, %arg1 : i32, i32
  }
}

</mosaic_0001>

<llo_original>
// kernel: tpu_custom_call.1
$region0: #{tpu_custom_call.1}
  #allocation0 [shape = 'u32[]', space=smem, size = 0x4, offset = 0x4, fixed_abs, tag = 'smem constant byte address 0x4 - core index']
  #allocation1 [shape = 'u32[144,128]{1,0:T(1,128)}', space=vmem, size = 0x12000, scoped, tag = 'internal scratch']
  #allocation2 [shape = 'f32[16,128]{1,0:T(8,128)}', space=vmem, size = 0x2000, scoped, tag = 'scratch operand']
  %s0 = inlined_call_operand.hbm [shape: f32[16,128], index: 0, kind: input, shape index: {}]
  %s1 = inlined_call_operand.hbm [shape: f32[128,128], index: 1, kind: input, shape index: {}]
  %s2 = inlined_call_operand.vmem [shape: f32[1,128], index: 2, kind: input, shape index: {}]
  %s3 = inlined_call_operand.hbm [shape: f32[16,128], index: 3, kind: input, shape index: {}]
  %s4 = inlined_call_operand.hbm [shape: f32[16,128], index: 4, kind: output, shape index: {}]
  %s5 = sld [smem:[#allocation0]]
  $region46: #{tpu_custom_call.1} parent=0
    _
  %s7 = ssub.s32 1, %s5
  %s8 = scalar_select 0, %s7, %s5
  $region1: #{tpu_custom_call.1} parent=0
    #allocation3 [shape = 'u8[8192]{0}', space=vmem, size = 0x2000, scoped, tag = 'input window, operand 0, single buffered']
    #allocation4 [shape = 's32[1]{0}', space=sflag, size = 0x4, scoped, tag = 'scoped memory for tpu_custom_call.1']
    #allocation5 [shape = 's32[1]{0}', space=sflag, size = 0x4, scoped, tag = 'scoped memory for tpu_custom_call.1']
    #allocation6 [shape = 'u8[65536]{0}', space=vmem, size = 0x10000, scoped, tag = 'input window, operand 1, single buffered']
    #allocation7 [shape = 's32[1]{0}', space=sflag, size = 0x4, scoped, tag = 'scoped memory for tpu_custom_call.1']
    #allocation8 [shape = 'u8[8192]{0}', space=vmem, size = 0x2000, scoped, tag = 'input window, operand 3, single buffered']
    #allocation9 [shape = 'u8[8192]{0}', space=vmem, size = 0x2000, scoped, tag = 'output window, operand 0, single buffered']
    %9 = vsyncpa [#allocation4], 0
    %10 = vsyncpa [#allocation7], 0
    %11 = vsyncpa [#allocation5], 0
    // Predicated region
    $region2: #{tpu_custom_call.1} parent=1 // pred_check
      _
    $region3: #{tpu_custom_call.1} parent=1 // pred_check_branch
      %13 = sbr.rel (0) target = $region5
    $region4: #{tpu_custom_call.1} parent=1 // pred_region
      %s15 = ssub.s32 256, 256
      %16 = vsyncadd [#allocation4], %s15
      %s17 = sshll.u32 [#allocation3], 4
      %s18 = int_to_ptr.vmem [resolvable:$true] %s17
      %23 = dma.hbm_to_vmem [thread:$0]  %s0, 256, %s18, [#allocation4], 128, 128, 8
    $region5: #{tpu_custom_call.1} parent=1 // pred_fallthru
      _
    // Predicated region
    $region6: #{tpu_custom_call.1} parent=1 // pred_check
      _
    $region7: #{tpu_custom_call.1} parent=1 // pred_check_branch
      %25 = sbr.rel (0) target = $region9
    $region8: #{tpu_custom_call.1} parent=1 // pred_region
      %s27 = ssub.s32 2048, 2048
      %28 = vsyncadd [#allocation7], %s27
      %s29 = sshll.u32 [#allocation6], 4
      %s30 = int_to_ptr.vmem [resolvable:$true] %s29
      %35 = dma.hbm_to_vmem [thread:$0]  %s1, 2048, %s30, [#allocation7], 128, 128, 8
    $region9: #{tpu_custom_call.1} parent=1 // pred_fallthru
      _
    // Predicated region
    $region10: #{tpu_custom_call.1} parent=1 // pred_check
      _
    $region11: #{tpu_custom_call.1} parent=1 // pred_check_branch
      %37 = sbr.rel (0) target = $region13
    $region12: #{tpu_custom_call.1} parent=1 // pred_region
      _
    $region13: #{tpu_custom_call.1} parent=1 // pred_fallthru
      _
    // Predicated region
    $region14: #{tpu_custom_call.1} parent=1 // pred_check
      _
    $region15: #{tpu_custom_call.1} parent=1 // pred_check_branch
      %39 = sbr.rel (0) target = $region17
    $region16: #{tpu_custom_call.1} parent=1 // pred_region
      %s41 = ssub.s32 256, 256
      %42 = vsyncadd [#allocation7], %s41
      %s43 = sshll.u32 [#allocation8], 4
      %s44 = int_to_ptr.vmem [resolvable:$true] %s43
      %49 = dma.hbm_to_vmem [thread:$0]  %s3, 256, %s44, [#allocation7], 128, 128, 8
    $region17: #{tpu_custom_call.1} parent=1 // pred_fallthru
      _
    // Predicated region
    $region18: #{tpu_custom_call.1} parent=1 // pred_check
      _
    $region19: #{tpu_custom_call.1} parent=1 // pred_check_branch
      %51 = sbr.rel (0) target = $region21
    $region20: #{tpu_custom_call.1} parent=1 // pred_region
      %52 = dma.done [#allocation4], 256
    $region21: #{tpu_custom_call.1} parent=1 // pred_fallthru
      _
    // Predicated region
    $region22: #{tpu_custom_call.1} parent=1 // pred_check
      _
    $region23: #{tpu_custom_call.1} parent=1 // pred_check_branch
      %54 = sbr.rel (0) target = $region25
    $region24: #{tpu_custom_call.1} parent=1 // pred_region
      %55 = dma.done [#allocation7], 2048
    $region25: #{tpu_custom_call.1} parent=1 // pred_fallthru
      _
    // Predicated region
    $region26: #{tpu_custom_call.1} parent=1 // pred_check
      _
    $region27: #{tpu_custom_call.1} parent=1 // pred_check_branch
      %57 = sbr.rel (0) target = $region29
    $region28: #{tpu_custom_call.1} parent=1 // pred_region
      %58 = dma.done [#allocation7], 256
    $region29: #{tpu_custom_call.1} parent=1 // pred_fallthru
      _
    %p60 = scmp.eq.s32.totalorder 0, 0
    // Predicated region
    $region30: #{tpu_custom_call.1} parent=1 // pred_check
      %p61 = pneg %p60
    $region31: #{tpu_custom_call.1} parent=1 // pred_check_branch
      %63 = sbr.rel (%p61) target = $region33
    $region32: #{tpu_custom_call.1} parent=1 // pred_region
      %64 = vst [vmem:[#allocation2] sm:$0xff] 0.0
      %65 = vst [vmem:[#allocation2 + $0x8] sm:$0xff] 0.0
    $region33: #{tpu_custom_call.1} parent=1 // pred_fallthru
      _
    %v66 = vld [vmem:[#allocation3] sm:$0xff]
    %v67 = vld [vmem:[#allocation3 + $0x8] sm:$0xff]
    %v68 = vpack.c.bf16 %v67, %v66
    %v69 = vld [vmem:[#allocation6] sm:$0xff]
    %v70 = vld [vmem:[#allocation6 + $0x8] sm:$0xff]
    %v71 = vld [vmem:[#allocation6 + $0x10] sm:$0xff]
    %v72 = vld [vmem:[#allocation6 + $0x18] sm:$0xff]
    %v73 = vld [vmem:[#allocation6 + $0x20] sm:$0xff]
    %v74 = vld [vmem:[#allocation6 + $0x28] sm:$0xff]
    %v75 = vld [vmem:[#allocation6 + $0x30] sm:$0xff]
    %v76 = vld [vmem:[#allocation6 + $0x38] sm:$0xff]
    %v77 = vld [vmem:[#allocation6 + $0x40] sm:$0xff]
    %v78 = vld [vmem:[#allocation6 + $0x48] sm:$0xff]
    %v79 = vld [vmem:[#allocation6 + $0x50] sm:$0xff]
    %v80 = vld [vmem:[#allocation6 + $0x58] sm:$0xff]
    %v81 = vld [vmem:[#allocation6 + $0x60] sm:$0xff]
    %v82 = vld [vmem:[#allocation6 + $0x68] sm:$0xff]
    %v83 = vld [vmem:[#allocation6 + $0x70] sm:$0xff]
    %v84 = vld [vmem:[#allocation6 + $0x78] sm:$0xff]
    %v85 = vpack.c.bf16 %v70, %v69
    %v86 = vpack.c.bf16 %v72, %v71
    %v87 = vpack.c.bf16 %v74, %v73
    %v88 = vpack.c.bf16 %v76, %v75
    %v89 = vpack.c.bf16 %v78, %v77
    %v90 = vpack.c.bf16 %v80, %v79
    %v91 = vpack.c.bf16 %v82, %v81
    %v92 = vpack.c.bf16 %v84, %v83
    %v93 = vld [vmem:[#allocation2] sm:$0xff]
    %v94 = vld [vmem:[#allocation2 + $0x8] sm:$0xff]
    %95 = vmatprep.subr.bf16.mxu0 0
    %96 = vmatpush1.bf16.xpose.msra.mxu0 %v92
    %97 = vmatprep.subr.bf16.mxu0 0
    %98 = vmatpush1.bf16.xpose.msra.mxu0 %v91
    %99 = vmatprep.subr.bf16.mxu0 0
    %100 = vmatpush1.bf16.xpose.msra.mxu0 %v90
    %101 = vmatprep.subr.bf16.mxu0 0
    %102 = vmatpush1.bf16.xpose.msra.mxu0 %v89
    %103 = vmatprep.subr.bf16.mxu0 0
    %104 = vmatpush1.bf16.xpose.msra.mxu0 %v88
    %105 = vmatprep.subr.bf16.mxu0 0
    %106 = vmatpush1.bf16.xpose.msra.mxu0 %v87
    %107 = vmatprep.subr.bf16.mxu0 0
    %108 = vmatpush1.bf16.xpose.msra.mxu0 %v86
    %109 = vmatprep.subr.bf16.mxu0 0
    %110 = vmatpush1.bf16.xpose.msra.mxu0 %v85
    %111 = vmatprep.subr.bf16.mxu0 0
    %112 = vmatpush2.bf16.xpose.msra.mxu0 0
    %113 = vmatprep.subr.bf16.mxu0 0
    %114 = vmatpush2.bf16.xpose.msra.mxu0 0
    %115 = vmatprep.subr.bf16.mxu0 0
    %116 = vmatpush2.bf16.xpose.msra.mxu0 0
    %117 = vmatprep.subr.bf16.mxu0 0
    %118 = vmatpush2.bf16.xpose.msra.mxu0 0
    %119 = vmatprep.subr.bf16.mxu0 0
    %120 = vmatpush2.bf16.xpose.msra.mxu0 0
    %121 = vmatprep.subr.bf16.mxu0 0
    %122 = vmatpush2.bf16.xpose.msra.mxu0 0
    %123 = vmatprep.subr.bf16.mxu0 0
    %124 = vmatpush2.bf16.xpose.msra.mxu0 0
    %125 = vmatprep.subr.bf16.mxu0 0
    %126 = vmatpush2.bf16.xpose.msra.mxu0 0
    %127 = vmatprep.mubr.bf16.mxu0 0
    %128 = vmatmul.mubr.bf16.gmra.mxu0 %v68
    %v129 = vpop.f32.mrf.mxu0
    %v130 = vadd.f32 0.0, %v129
    %v131 = vpop.f32.mrf.mxu0
    %v132 = vpop.f32.mrf.mxu0
    %v133 = vadd.f32 0.0, %v132
    %v134 = vpop.f32.mrf.mxu0
    %135 = vdwg.mxu0
    %v136 = vadd.f32 %v93, %v130
    %v137 = vadd.f32 %v94, %v133
    %138 = vst [vmem:[#allocation2] sm:$0xff] %v136
    %139 = vst [vmem:[#allocation2 + $0x8] sm:$0xff] %v137
    // Predicated region
    $region34: #{tpu_custom_call.1} parent=1 // pred_check
      %p140 = pneg %p60
    $region35: #{tpu_custom_call.1} parent=1 // pred_check_branch
      %142 = sbr.rel (%p140) target = $region37
    $region36: #{tpu_custom_call.1} parent=1 // pred_region
      %v143 = vld [vmem:[%s2] sm:$0x1]
      %v144 = vld [vmem:[#allocation8] sm:$0xff]
      %v145 = vld [vmem:[#allocation8 + $0x8] sm:$0xff]
      %v146 = vld [vmem:[#allocation2] sm:$0xff]
      %v147 = vld [vmem:[#allocation2 + $0x8] sm:$0xff]
      %v149 = vlaneseq
      %v150 = vshrl.u32 %v149, 7
      %v151 = vsub.s32 0, %v150
      %v152 = vrot.slane %v143, %v151
      %v154 = vadd.f32 %v146, %v152
      %v155 = vadd.f32 %v147, %v152
      %v156 = vadd.f32 %v154, %v144
      %v157 = vadd.f32 %v155, %v145
      %158 = vst [vmem:[#allocation9] sm:$0xff] %v156
      %159 = vst [vmem:[#allocation9 + $0x8] sm:$0xff] %v157
    $region37: #{tpu_custom_call.1} parent=1 // pred_fallthru
      _
    // Predicated region
    $region38: #{tpu_custom_call.1} parent=1 // pred_check
      _
    $region39: #{tpu_custom_call.1} parent=1 // pred_check_branch
      %161 = sbr.rel (0) target = $region41
    $region40: #{tpu_custom_call.1} parent=1 // pred_region
      %s163 = ssub.s32 256, 256
      %164 = vsyncadd [#allocation5], %s163
      %s165 = sshll.u32 [#allocation9], 4
      %s166 = int_to_ptr.vmem [resolvable:$true] %s165
      %171 = dma.vmem_to_hbm [thread:$0]  %s166, 256, %s4, [#allocation5], 128, 128, 8
    $region41: #{tpu_custom_call.1} parent=1 // pred_fallthru
      _
    // Predicated region
    $region42: #{tpu_custom_call.1} parent=1 // pred_check
      _
    $region43: #{tpu_custom_call.1} parent=1 // pred_check_branch
      %173 = sbr.rel (0) target = $region45
    $region44: #{tpu_custom_call.1} parent=1 // pred_region
      %174 = dma.done [#allocation5], 256
    $region45: #{tpu_custom_call.1} parent=1 // pred_fallthru
      _
    %175 = vsyncpa [#allocation4], 1
    %176 = vsyncpa [#allocation7], 1
    %177 = vsyncpa [#allocation5], 1

</llo_original>
